<compile_context>
chip_gen: v7x
topology: tpu7x:2x2x1
jax: 0.10.0
libtpu: 0.0.40
codegen_flags: <defaults>
</compile_context>

<pallas_src>
import functools

import jax
import jax.numpy as jnp
from jax import lax
from jax.experimental import pallas as pl
from jax.experimental.pallas import tpu as pltpu


def _round_up(a, b):
    return -(-a // b) * b


def _vmem_limit_bytes():
    """Per-generation VMEM limit: ~3/4 of physical, capped at 100 MiB."""
    cap = 64 * 1024 * 1024
    try:
        info = pltpu.get_tpu_info()
        c = int(getattr(info, "vmem_capacity_bytes", cap))
        if c > 0:
            cap = c
    except Exception:
        pass
    return min(cap * 3 // 4, 100 * 1024 * 1024)


def _attention_kernel(q_ref, kv_ref, ctx_ref, att_ref, *, t_valid):
    # q_ref : (Bb, tq, D)   query rows for this (batch-block, query-tile)
    # kv_ref: (Bb, Tp, D)   all (padded) time steps for this batch-block
    qi = pl.program_id(1)
    q = q_ref[...]
    kv = kv_ref[...]
    tq = q.shape[1]
    tp = kv.shape[1]

    # scores = q @ kv^T in the native input dtype (fast bf16 MXU path when the
    # caller passes bf16, full fidelity for f32); f32 accumulation either way.
    scores = jnp.einsum("bqd,bkd->bqk", q, kv,
                        preferred_element_type=jnp.float32)   # (Bb, tq, Tp)

    row = qi * tq + lax.broadcasted_iota(jnp.int32, (tq, tp), 0)
    col = lax.broadcasted_iota(jnp.int32, (tq, tp), 1)

    # Fused mask (one 3-D select): strictly-lower-triangular entries keep their
    # score; the diagonal/upper triangle get -1e9 (identical to
    # tril(-1) + triu(-1e9)); zero-padded key columns get -inf so they carry
    # exactly 0 probability (preserves the reference's uniform 1/T row 0).
    neg_big = jnp.float32(-1.0e9)
    if tp == t_valid:
        fill = neg_big
    else:
        fill = jnp.where(col < t_valid, neg_big, jnp.float32(-jnp.inf))[None]
    scores = jnp.where((col < row)[None], scores, fill)

    # Softmax along keys (f32).  Exact per-row divide (only Bb*tq scalars), so
    # rows sum to 1 to f32 precision (the approx reciprocal was too coarse).
    m = jnp.max(scores, axis=-1, keepdims=True)
    e = jnp.exp(scores - m)
    denom = jnp.sum(e, axis=-1, keepdims=True)
    att = e * (1.0 / denom)                                    # (Bb, tq, Tp)

    # ctx = att @ kv : kv stays in its native dtype (no per-step cast of the
    # resident slab); att is cast once to match (a no-op for f32 inputs).
    ctx = jnp.einsum("bqk,bkd->bqd", att.astype(kv.dtype), kv,
                     preferred_element_type=jnp.float32)       # (Bb, tq, D)

    att_ref[...] = att.astype(att_ref.dtype)
    ctx_ref[...] = ctx.astype(ctx_ref.dtype)


def attention(x, *, block_q=None, block_b=None):
    """x: (B, T, D) -> (ctx (B, T, D), att (B, T, T)), matching the PyTorch module."""
    B, T, D = x.shape
    isize = jnp.dtype(x.dtype).itemsize

    # Lane-dense att output: pad T up to a multiple of 128 when it exceeds one
    # lane group; tiny T stays a single full-extent block.
    Tp = T if T <= 128 else _round_up(T, 128)

    vmem_limit = _vmem_limit_bytes()
    budget = (vmem_limit * 7) // 10   # headroom for compiler-managed temporaries

    def footprint(bb, tq):
        # Pipelined (double-buffered) I/O blocks ...
        io = 2 * bb * tq * D * isize          # q tile
        io += 2 * bb * Tp * D * isize         # kv slab (index constant along q)
        io += 2 * bb * tq * D * isize         # ctx out tile
        io += 2 * bb * tq * Tp * isize        # att out tile
        # ... plus the in-kernel working set.
        tmp = 3 * bb * tq * Tp * 4            # scores / exp / att (f32)
        if isize != 4:
            tmp += bb * tq * Tp * isize       # att cast for the ctx matmul
        tmp += 2 * tq * Tp * 4                # iota row/col masks
        tmp += bb * tq * (D + 2) * 4          # f32 ctx accumulator, m, denom
        return io + tmp

    if block_q is None:
        if Tp <= 256:
            cands = [Tp]
        else:
            cands = [c for c in (512, 256, 128, 64, 32, 16, 8) if Tp % c == 0]
        block_q = cands[0]
        for c in cands:
            block_q = c
            if footprint(1, c) <= budget:
                break
    block_q = min(block_q, Tp)
    assert Tp % block_q == 0, "block_q must divide the padded sequence length"

    if block_b is None:
        block_b = max(1, min(B, budget // max(footprint(1, block_q), 1)))
        while block_b > 1 and footprint(block_b, block_q) > budget:
            block_b -= 1
    block_b = max(1, min(block_b, B))

    # Multi-TensorCore parts (v7x): keep >= 2 parallel grid steps so a core
    # never idles when the query axis collapses to a single tile.
    if Tp // block_q == 1 and B >= 2:
        block_b = min(block_b, (B + 1) // 2)

    Bp = _round_up(B, block_b)

    if (Bp, Tp) != (B, T):
        x_p = jnp.zeros((Bp, Tp, D), x.dtype).at[:B, :T, :].set(x)
    else:
        x_p = x

    grid = (Bp // block_b, Tp // block_q)
    kernel = functools.partial(_attention_kernel, t_valid=T)

    cost = pl.CostEstimate(
        flops=4 * B * T * Tp * D,                    # two (T, Tp, D) matmuls
        transcendentals=B * T * Tp,                  # exp
        bytes_accessed=isize * (3 * B * T * D + B * T * Tp),
    )

    ctx_p, att_p = pl.pallas_call(
        kernel,
        out_shape=(
            jax.ShapeDtypeStruct((Bp, Tp, D), x.dtype),    # context vectors
            jax.ShapeDtypeStruct((Bp, Tp, Tp), x.dtype),   # attention weights
        ),
        grid_spec=pltpu.PrefetchScalarGridSpec(
            num_scalar_prefetch=0,
            grid=grid,
            in_specs=[
                # query tile (changes every grid step)
                pl.BlockSpec((block_b, block_q, D), lambda b, q: (b, q, 0)),
                # full key/value slab for this batch block; its block index is
                # constant along the fast-varying q axis, so it is DMA'd once
                # per batch block and stays resident across query tiles.
                pl.BlockSpec((block_b, Tp, D), lambda b, q: (b, 0, 0)),
            ],
            out_specs=[
                pl.BlockSpec((block_b, block_q, D), lambda b, q: (b, q, 0)),
                # lane-dense att block: last dim = full (128-aligned) Tp
                pl.BlockSpec((block_b, block_q, Tp), lambda b, q: (b, q, 0)),
            ],
        ),
        compiler_params=pltpu.CompilerParams(
            dimension_semantics=("parallel", "parallel"),
            vmem_limit_bytes=vmem_limit,
        ),
        cost_estimate=cost,
    )(x_p, x_p)

    if (Bp, Tp) != (B, T):
        ctx_p = ctx_p[:B, :T, :]
        att_p = att_p[:B, :T, :T]
    return ctx_p, att_p


def _attention_ref(x):
    """Pure-JAX reference mirroring the PyTorch forward, for verification."""
    scores = jnp.einsum("btd,bsd->bts", x, x)
    scores = jnp.tril(scores, k=-1)
    scores = scores + jnp.triu(jnp.full_like(scores, -1.0e9), k=0)
    att = jax.nn.softmax(scores, axis=-1)
    ctx = jnp.einsum("bts,bsd->btd", att, x)
    return ctx, att


if __name__ == "__main__":
    key = jax.random.PRNGKey(0)
    B, T, D = 2, 8, 32
    x = jax.random.normal(key, (B, T, D), dtype=jnp.float32)

    ctx, att = attention(x)
    jax.block_until_ready((ctx, att))

    ctx_ref, att_ref = _attention_ref(x)
    assert ctx.shape == (B, T, D) and att.shape == (B, T, T)

    # Native-f32 matmuls + exact softmax normalisation -> tight agreement.
    assert jnp.allclose(att, att_ref, atol=2e-3, rtol=2e-3)
    assert jnp.allclose(ctx, ctx_ref, atol=2e-3, rtol=2e-3)
    # each row sums to 1 (row 0 is uniform 1/T per the reference code)
    assert jnp.allclose(att.sum(-1), jnp.ones((B, T)), atol=1e-3)
    assert jnp.allclose(att[:, 0, :], 1.0 / T, atol=1e-3)
    # diagonal and above are exactly zero for rows >= 1
    assert jnp.allclose(jnp.triu(att[:, 1:, 1:], k=0), 0.0, atol=1e-6)

    print("KERNEL_OK")
</pallas_src>

<mosaic_0001>
module attributes {stable_mosaic.version = 11 : i64} {
  func.func @_attention_kernel(%arg0: i32, %arg1: i32, %arg2: memref<1x8x32xf32, #tpu.memory_space<vmem>>, %arg3: memref<1x8x32xf32, #tpu.memory_space<vmem>>, %arg4: memref<1x8x32xf32, #tpu.memory_space<vmem>>, %arg5: memref<1x8x8xf32, #tpu.memory_space<vmem>>) attributes {dimension_semantics = [#tpu.dimension_semantics<parallel>, #tpu.dimension_semantics<parallel>], iteration_bounds = array<i64: 2, 1>, scalar_prefetch = 0 : i64, scratch_operands = 0 : i64, tpu.core_type = #tpu.core_type<tc>, window_params = [{transform_indices = @transform_0, window_bounds = array<i64: 1, 8, 32>}, {transform_indices = @transform_1, window_bounds = array<i64: 1, 8, 32>}, {transform_indices = @transform_2, window_bounds = array<i64: 1, 8, 32>}, {transform_indices = @transform_3, window_bounds = array<i64: 1, 8, 8>}]} {
    %c0 = arith.constant 0 : index
    %c0_0 = arith.constant 0 : index
    %c0_1 = arith.constant 0 : index
    %0 = vector.load %arg2[%c0, %c0_0, %c0_1] : memref<1x8x32xf32, #tpu.memory_space<vmem>>, vector<1x8x32xf32>
    %c0_2 = arith.constant 0 : index
    %c0_3 = arith.constant 0 : index
    %c0_4 = arith.constant 0 : index
    %1 = vector.load %arg3[%c0_2, %c0_3, %c0_4] : memref<1x8x32xf32, #tpu.memory_space<vmem>>, vector<1x8x32xf32>
    "tpu.trace_start"() <{level = 10 : i32, message = "bqd,bkd->bqk"}> : () -> ()
    %cst = arith.constant dense<0.000000e+00> : vector<1x8x8xf32>
    %2 = tpu.matmul %0, %1, %cst {dimension_numbers = #tpu.dot_dimension_numbers<[2], [2], [1], [1], [0, 0, 0, 1, 1, 1], [0], [0]>} : vector<1x8x32xf32>, vector<1x8x32xf32>, vector<1x8x8xf32> -> vector<1x8x8xf32>
    "tpu.trace_stop"() : () -> ()
    %c8_i32 = arith.constant 8 : i32
    %3 = arith.muli %arg1, %c8_i32 : i32
    %4 = tpu.iota {dimensions = array<i32: 0>} : vector<8x8xi32>
    %5 = vector.broadcast %3 : i32 to vector<8x8xi32>
    %6 = arith.addi %5, %4 : vector<8x8xi32>
    %7 = tpu.iota {dimensions = array<i32: 1>} : vector<8x8xi32>
    %8 = arith.cmpi slt, %7, %6 : vector<8x8xi32>
    %9 = vector.shape_cast %8 : vector<8x8xi1> to vector<1x8x8xi1>
    %cst_5 = arith.constant -1.000000e+09 : f32
    %10 = vector.broadcast %cst_5 : f32 to vector<1x8x8xf32>
    %11 = arith.select %9, %2, %10 : vector<1x8x8xi1>, vector<1x8x8xf32>
    %cst_6 = arith.constant dense<0xFF800000> : vector<1x8xf32>
    %12 = vector.multi_reduction <maximumf>, %11, %cst_6 [2] : vector<1x8x8xf32> to vector<1x8xf32>
    %13 = vector.shape_cast %12 : vector<1x8xf32> to vector<1x8x1xf32>
    %14 = vector.broadcast %13 : vector<1x8x1xf32> to vector<1x8x8xf32>
    %15 = arith.subf %11, %14 : vector<1x8x8xf32>
    %16 = math.exp %15 : vector<1x8x8xf32>
    %cst_7 = arith.constant dense<0.000000e+00> : vector<1x8xf32>
    %17 = vector.multi_reduction <add>, %16, %cst_7 [2] : vector<1x8x8xf32> to vector<1x8xf32>
    %18 = vector.shape_cast %17 : vector<1x8xf32> to vector<1x8x1xf32>
    %cst_8 = arith.constant 1.000000e+00 : f32
    %19 = vector.broadcast %cst_8 : f32 to vector<1x8x1xf32>
    %20 = arith.divf %19, %18 : vector<1x8x1xf32>
    %21 = vector.broadcast %20 : vector<1x8x1xf32> to vector<1x8x8xf32>
    %22 = arith.mulf %16, %21 : vector<1x8x8xf32>
    "tpu.trace_start"() <{level = 10 : i32, message = "bqk,bkd->bqd"}> : () -> ()
    %cst_9 = arith.constant dense<0.000000e+00> : vector<1x8x32xf32>
    %23 = tpu.matmul %22, %1, %cst_9 {dimension_numbers = #tpu.dot_dimension_numbers<[2], [1], [1], [2], [0, 0, 0, 1, 1, 2], [0], [0]>} : vector<1x8x8xf32>, vector<1x8x32xf32>, vector<1x8x32xf32> -> vector<1x8x32xf32>
    "tpu.trace_stop"() : () -> ()
    %c0_10 = arith.constant 0 : index
    %c0_11 = arith.constant 0 : index
    %c0_12 = arith.constant 0 : index
    %24 = vector.load %arg5[%c0_10, %c0_11, %c0_12] : memref<1x8x8xf32, #tpu.memory_space<vmem>>, vector<1x8x8xf32>
    tpu.vector_store %arg5[%c0_10, %c0_11, %c0_12], %22 {strides = array<i32>} : memref<1x8x8xf32, #tpu.memory_space<vmem>>, vector<1x8x8xf32>,
    %c0_13 = arith.constant 0 : index
    %c0_14 = arith.constant 0 : index
    %c0_15 = arith.constant 0 : index
    %25 = vector.load %arg4[%c0_13, %c0_14, %c0_15] : memref<1x8x32xf32, #tpu.memory_space<vmem>>, vector<1x8x32xf32>
    tpu.vector_store %arg4[%c0_13, %c0_14, %c0_15], %23 {strides = array<i32>} : memref<1x8x32xf32, #tpu.memory_space<vmem>>, vector<1x8x32xf32>,
    return
  }
  func.func @transform_0(%arg0: i32, %arg1: i32) -> (i32, i32, i32) {
    %c0_i32 = arith.constant 0 : i32
    %c0_i32_0 = arith.constant 0 : i32
    return %arg0, %arg1, %c0_i32 : i32, i32, i32
  }
  func.func @transform_1(%arg0: i32, %arg1: i32) -> (i32, i32, i32) {
    %c0_i32 = arith.constant 0 : i32
    %c0_i32_0 = arith.constant 0 : i32
    %c0_i32_1 = arith.constant 0 : i32
    return %arg0, %c0_i32, %c0_i32_0 : i32, i32, i32
  }
  func.func @transform_2(%arg0: i32, %arg1: i32) -> (i32, i32, i32) {
    %c0_i32 = arith.constant 0 : i32
    %c0_i32_0 = arith.constant 0 : i32
    return %arg0, %arg1, %c0_i32 : i32, i32, i32
  }
  func.func @transform_3(%arg0: i32, %arg1: i32) -> (i32, i32, i32) {
    %c0_i32 = arith.constant 0 : i32
    %c0_i32_0 = arith.constant 0 : i32
    return %arg0, %arg1, %c0_i32 : i32, i32, i32
  }
}

</mosaic_0001>

<llo_original>
// kernel: tpu_custom_call.1
$region0: #{tpu_custom_call.1}
  #allocation0 [shape = 'u32[]', space=smem, size = 0x4, offset = 0x4, fixed_abs, tag = 'smem constant byte address 0x4 - core index']
  #allocation1 [shape = 'u32[144,128]{1,0:T(1,128)}', space=vmem, size = 0x12000, scoped, tag = 'internal scratch']
  %s0 = inlined_call_operand.hbm [shape: f32[2,8,32], index: 0, kind: input, shape index: {}]
  %s1 = inlined_call_operand.hbm [shape: f32[2,8,32], index: 1, kind: input, shape index: {}]
  %s2 = inlined_call_operand.hbm [shape: f32[2,8,32], index: 2, kind: output, shape index: {0}]
  %s3 = inlined_call_operand.hbm [shape: f32[2,8,8], index: 3, kind: output, shape index: {1}]
  %4 = xla_tuple %s2, %s3
  %s5 = sld [smem:[#allocation0]]
  $region57: #{tpu_custom_call.1} parent=0
    _
  %s7 = ssub.s32 1, %s5
  %s8 = scalar_select 0, %s7, %s5
  $region1: #{tpu_custom_call.1} parent=0
    #allocation2 [shape = 'u8[8192]{0}', space=vmem, size = 0x2000, scoped, tag = 'input window, operand 0']
    #allocation3 [shape = 's32[2]{0}', space=sflag, size = 0x8, scoped, tag = 'scoped memory for tpu_custom_call.1']
    #allocation4 [shape = 's32[2]{0}', space=sflag, size = 0x8, scoped, tag = 'scoped memory for tpu_custom_call.1']
    #allocation5 [shape = 'u8[8192]{0}', space=vmem, size = 0x2000, scoped, tag = 'input window, operand 1']
    #allocation6 [shape = 's32[2]{0}', space=sflag, size = 0x8, scoped, tag = 'scoped memory for tpu_custom_call.1']
    #allocation7 [shape = 'u8[8192]{0}', space=vmem, size = 0x2000, scoped, tag = 'output window, operand 0']
    #allocation8 [shape = 'u8[8192]{0}', space=vmem, size = 0x2000, scoped, tag = 'output window, operand 1']
    #allocation9 [shape = 's32[2]{0}', space=sflag, size = 0x8, scoped, tag = 'scoped memory for tpu_custom_call.1']
    %9 = vsyncpa [#allocation3], 0
    %s10 = scalar_lea.sflag [#allocation3], 1
    %11 = vsyncpa %s10, 0
    %12 = vsyncpa [#allocation6], 0
    %s13 = scalar_lea.sflag [#allocation6], 1
    %14 = vsyncpa %s13, 0
    %15 = vsyncpa [#allocation4], 0
    %s16 = scalar_lea.sflag [#allocation4], 1
    %17 = vsyncpa %s16, 0
    %18 = vsyncpa [#allocation9], 0
    %s19 = scalar_lea.sflag [#allocation9], 1
    %20 = vsyncpa %s19, 0
    loop: start=0, step=1, limit=4
    $region2: #{tpu_custom_call.1} parent=1 // loop_pre_header
      _
    $region3: #{tpu_custom_call.1} parent=1 // loop_header
      %s22 = sphi 0, %s26
      %p23 = scmp.ge.s32.totalorder %s22, 4
      %s29 = sphi 0, %s41
      %s30 = sphi 0, %s37
      %s31 = sphi 0, %s29
      %s32 = sphi 0, %s30
      %s33 = sphi 0, %s31
      %s34 = sphi 0, %s32
      %s46 = sphi 0, %s48
      %s49 = sphi 0, %s46
      %s50 = sphi 0, %s49
      %s66 = sphi 0, %s50
      %s72 = sphi 0, %s74
      %s75 = sphi 0, %s72
      %s76 = sphi 0, %s75
      %s92 = sphi 0, %s76
      %s100 = sphi 0, %s102
      %s103 = sphi 0, %s100
      %s104 = sphi 0, %s103
      %s120 = sphi 0, %s104
      %s128 = sphi 0, %s130
      %s131 = sphi 0, %s128
      %s132 = sphi 0, %s131
      %s148 = sphi 0, %s132
    $region4: #{tpu_custom_call.1} parent=1 // loop_header_branch
      %25 = sbr.rel (%p23) target = $region8
    $region5: #{tpu_custom_call.1} parent=1 // loop_body
      %s27 = ssub.s32 %s22, 1
      %s28 = ssub.s32 %s22, 2
      %s35 = sadd.s32 1, %s30
      %p36 = scmp.ge.s32.totalorder %s35, 1
      %s37 = scalar_select %p36, 0, %s35
      %s38 = sadd.s32 1, %s29
      %s39 = scalar_select %p36, %s38, %s29
      %p40 = scmp.ge.s32.totalorder %s39, 2
      %s41 = scalar_select %p40, 0, %s39
      %s42 = ssub.s32 %s29, %s41
      %s43 = ssub.s32 %s30, %s37
      %s44 = sor.u32 %s42, %s43
      %p45 = scmp.eq.s32.totalorder %s44, 0
      %s47 = sadd.s32 %s46, 1
      %s48 = scalar_select %p45, %s46, %s47
      %p51 = pneg %p45
      %p52 = scmp.eq.s32.totalorder %s22, 1
      %p53 = por %p51, %p52
      %p54 = scmp.ne.s32.totalorder %s46, %s49
      %p55 = scmp.eq.s32.totalorder %s22, 0
      %p56 = por %p54, %p55
      %p57 = scmp.ne.s32.totalorder %s46, %s49
      %p58 = scmp.eq.s32.totalorder %s27, 1
      %p59 = por %p57, %p58
      %p60 = scmp.ne.s32.totalorder %s49, %s50
      %p61 = scmp.eq.s32.totalorder %s27, 0
      %p62 = por %p60, %p61
      %p63 = scmp.ne.s32.totalorder %s49, %s50
      %p64 = scmp.eq.s32.totalorder %s28, 1
      %p65 = por %p63, %p64
      %p67 = scmp.ne.s32.totalorder %s50, %s66
      %p68 = scmp.eq.s32.totalorder %s28, 0
      %p69 = por %p67, %p68
      %s70 = ssub.s32 %s29, %s41
      %p71 = scmp.eq.s32.totalorder %s70, 0
      %s73 = sadd.s32 %s72, 1
      %s74 = scalar_select %p71, %s72, %s73
      %p77 = pneg %p71
      %p78 = scmp.eq.s32.totalorder %s22, 1
      %p79 = por %p77, %p78
      %p80 = scmp.ne.s32.totalorder %s72, %s75
      %p81 = scmp.eq.s32.totalorder %s22, 0
      %p82 = por %p80, %p81
      %p83 = scmp.ne.s32.totalorder %s72, %s75
      %p84 = scmp.eq.s32.totalorder %s27, 1
      %p85 = por %p83, %p84
      %p86 = scmp.ne.s32.totalorder %s75, %s76
      %p87 = scmp.eq.s32.totalorder %s27, 0
      %p88 = por %p86, %p87
      %p89 = scmp.ne.s32.totalorder %s75, %s76
      %p90 = scmp.eq.s32.totalorder %s28, 1
      %p91 = por %p89, %p90
      %p93 = scmp.ne.s32.totalorder %s76, %s92
      %p94 = scmp.eq.s32.totalorder %s28, 0
      %p95 = por %p93, %p94
      %s96 = ssub.s32 %s29, %s41
      %s97 = ssub.s32 %s30, %s37
      %s98 = sor.u32 %s96, %s97
      %p99 = scmp.eq.s32.totalorder %s98, 0
      %s101 = sadd.s32 %s100, 1
      %s102 = scalar_select %p99, %s100, %s101
      %p105 = pneg %p99
      %p106 = scmp.eq.s32.totalorder %s22, 1
      %p107 = por %p105, %p106
      %p108 = scmp.ne.s32.totalorder %s100, %s103
      %p109 = scmp.eq.s32.totalorder %s22, 0
      %p110 = por %p108, %p109
      %p111 = scmp.ne.s32.totalorder %s100, %s103
      %p112 = scmp.eq.s32.totalorder %s27, 1
      %p113 = por %p111, %p112
      %p114 = scmp.ne.s32.totalorder %s103, %s104
      %p115 = scmp.eq.s32.totalorder %s27, 0
      %p116 = por %p114, %p115
      %p117 = scmp.ne.s32.totalorder %s103, %s104
      %p118 = scmp.eq.s32.totalorder %s28, 1
      %p119 = por %p117, %p118
      %p121 = scmp.ne.s32.totalorder %s104, %s120
      %p122 = scmp.eq.s32.totalorder %s28, 0
      %p123 = por %p121, %p122
      %s124 = ssub.s32 %s29, %s41
      %s125 = ssub.s32 %s30, %s37
      %s126 = sor.u32 %s124, %s125
      %p127 = scmp.eq.s32.totalorder %s126, 0
      %s129 = sadd.s32 %s128, 1
      %s130 = scalar_select %p127, %s128, %s129
      %p133 = pneg %p127
      %p134 = scmp.eq.s32.totalorder %s22, 1
      %p135 = por %p133, %p134
      %p136 = scmp.ne.s32.totalorder %s128, %s131
      %p137 = scmp.eq.s32.totalorder %s22, 0
      %p138 = por %p136, %p137
      %p139 = scmp.ne.s32.totalorder %s128, %s131
      %p140 = scmp.eq.s32.totalorder %s27, 1
      %p141 = por %p139, %p140
      %p142 = scmp.ne.s32.totalorder %s131, %s132
      %p143 = scmp.eq.s32.totalorder %s27, 0
      %p144 = por %p142, %p143
      %p145 = scmp.ne.s32.totalorder %s131, %s132
      %p146 = scmp.eq.s32.totalorder %s28, 1
      %p147 = por %p145, %p146
      %p149 = scmp.ne.s32.totalorder %s132, %s148
      %p150 = scmp.eq.s32.totalorder %s28, 0
      %p151 = por %p149, %p150
      %p152 = scmp.le.s32.totalorder 1, %s22
      %p153 = scmp.lt.s32.totalorder %s22, 3
      %p154 = pnand %p152, %p153
      %p155 = pneg %p154
      // Predicated region
      $region9: #{tpu_custom_call.1} parent=5 // pred_check
        _
      $region10: #{tpu_custom_call.1} parent=5 // pred_check_branch
        %157 = sbr.rel (%p154) target = $region12
      $region11: #{tpu_custom_call.1} parent=5 // pred_region
        %s158 = ssub.s32 %s22, 1
      $region12: #{tpu_custom_call.1} parent=5 // pred_fallthru
        _
      %p159 = scmp.lt.s32.totalorder %s22, 2
      // Predicated region
      $region13: #{tpu_custom_call.1} parent=5 // pred_check
        %p160 = pneg %p159
      $region14: #{tpu_custom_call.1} parent=5 // pred_check_branch
        %162 = sbr.rel (%p160) target = $region16
      $region15: #{tpu_custom_call.1} parent=5 // pred_region
        // Predicated region
        $region17: #{tpu_custom_call.1} parent=15 // pred_check
          %p163 = pneg %p56
        $region18: #{tpu_custom_call.1} parent=15 // pred_check_branch
          %165 = sbr.rel (%p163) target = $region20
        $region19: #{tpu_custom_call.1} parent=15 // pred_region
          %s166 = sand.u32 %s46, 1
          %s167 = scalar_lea.sflag [#allocation3], %s166
          %s168 = sand.u32 %s46, 1
          %s169 = smul.addr %s168, 8
          %s170 = scalar_lea.vmem [#allocation2], %s169
          %s172 = ssub.s32 128, 128
          %173 = vsyncadd %s167, %s172
          %s174 = sadd.s32 %s30, %s29
          %s175 = smul.addr %s174, 128
          %s176 = scalar_lea.hbm %s0, %s175
          %s178 = sshll.u32 %s170, 4
          %s179 = int_to_ptr.vmem [resolvable:$true] %s178
          %181 = dma.hbm_to_vmem [thread:$0]  %s176, 128, %s179, %s167
        $region20: #{tpu_custom_call.1} parent=15 // pred_fallthru
          _
        // Predicated region
        $region21: #{tpu_custom_call.1} parent=15 // pred_check
          %p182 = pneg %p82
        $region22: #{tpu_custom_call.1} parent=15 // pred_check_branch
          %184 = sbr.rel (%p182) target = $region24
        $region23: #{tpu_custom_call.1} parent=15 // pred_region
          %s185 = sand.u32 %s72, 1
          %s186 = scalar_lea.sflag [#allocation6], %s185
          %s187 = sand.u32 %s72, 1
          %s188 = smul.addr %s187, 8
          %s189 = scalar_lea.vmem [#allocation5], %s188
          %s191 = ssub.s32 128, 128
          %192 = vsyncadd %s186, %s191
          %s193 = smul.addr %s29, 128
          %s194 = scalar_lea.hbm %s1, %s193
          %s196 = sshll.u32 %s189, 4
          %s197 = int_to_ptr.vmem [resolvable:$true] %s196
          %199 = dma.hbm_to_vmem [thread:$0]  %s194, 128, %s197, %s186
        $region24: #{tpu_custom_call.1} parent=15 // pred_fallthru
          _
      $region16: #{tpu_custom_call.1} parent=5 // pred_fallthru
        _
      %p200 = scmp.le.s32.totalorder 1, %s22
      %p201 = scmp.lt.s32.totalorder %s22, 3
      %p202 = pnand %p200, %p201
      %p203 = pneg %p202
      // Predicated region
      $region25: #{tpu_custom_call.1} parent=5 // pred_check
        _
      $region26: #{tpu_custom_call.1} parent=5 // pred_check_branch
        %205 = sbr.rel (%p202) target = $region28
      $region27: #{tpu_custom_call.1} parent=5 // pred_region
        %s206 = ssub.s32 %s22, 1
        %s207 = sand.u32 %s49, 1
        %s208 = scalar_lea.sflag [#allocation3], %s207
        %s209 = sand.u32 %s49, 1
        %s210 = smul.addr %s209, 8
        %s211 = scalar_lea.vmem [#allocation2], %s210
        // Predicated region
        $region29: #{tpu_custom_call.1} parent=27 // pred_check
          %p212 = pneg %p62
        $region30: #{tpu_custom_call.1} parent=27 // pred_check_branch
          %214 = sbr.rel (%p212) target = $region32
        $region31: #{tpu_custom_call.1} parent=27 // pred_region
          %215 = dma.done %s208, 128
        $region32: #{tpu_custom_call.1} parent=27 // pred_fallthru
          _
        %s216 = sand.u32 %s75, 1
        %s217 = scalar_lea.sflag [#allocation6], %s216
        %s218 = sand.u32 %s75, 1
        %s219 = smul.addr %s218, 8
        %s220 = scalar_lea.vmem [#allocation5], %s219
        // Predicated region
        $region33: #{tpu_custom_call.1} parent=27 // pred_check
          %p221 = pneg %p88
        $region34: #{tpu_custom_call.1} parent=27 // pred_check_branch
          %223 = sbr.rel (%p221) target = $region36
        $region35: #{tpu_custom_call.1} parent=27 // pred_region
          %224 = dma.done %s217, 128
        $region36: #{tpu_custom_call.1} parent=27 // pred_fallthru
          _
        %s225 = sand.u32 %s49, 1
        %s226 = scalar_lea.sflag [#allocation3], %s225
        %s227 = sand.u32 %s49, 1
        %s228 = smul.addr %s227, 8
        %s229 = scalar_lea.vmem [#allocation2], %s228
        %p230 = pneg %p62
        %p231 = pneg %p59
        %s232 = sand.u32 %s75, 1
        %s233 = scalar_lea.sflag [#allocation6], %s232
        %s234 = sand.u32 %s75, 1
        %s235 = smul.addr %s234, 8
        %s236 = scalar_lea.vmem [#allocation5], %s235
        %p237 = pneg %p88
        %p238 = pneg %p85
        %p239 = pneg %p116
        %p240 = pneg %p113
        %s241 = sand.u32 %s103, 1
        %s242 = scalar_lea.sflag [#allocation4], %s241
        %s243 = sand.u32 %s103, 1
        %s244 = smul.addr %s243, 8
        %s245 = scalar_lea.vmem [#allocation7], %s244
        %p246 = pneg %p144
        %p247 = pneg %p141
        %s248 = sand.u32 %s131, 1
        %s249 = scalar_lea.sflag [#allocation9], %s248
        %s250 = sand.u32 %s131, 1
        %s251 = smul.addr %s250, 8
        %s252 = scalar_lea.vmem [#allocation8], %s251
        %v253 = vld [vmem:[%s211] sm:$0xff]
        %v254 = vld [vmem:[%s220] sm:$0xff]
        %vm255 = vcmask 261120
        %v257 = vsel %vm255, %v253, 0
        %v260 = vsel %vm255, %v254, 0
        %262 = vmatprep.subr.mxu0 0.0
        %263 = vmatpush1.xpose.msra.mxu0 %v260
        %264 = vmatprep.subr.mxu0 0.0
        %265 = vmatpush1.xpose.msra.mxu0 0.0
        %266 = vmatprep.subr.mxu0 0.0
        %267 = vmatpush1.xpose.msra.mxu0 0.0
        %268 = vmatprep.subr.mxu0 0.0
        %269 = vmatpush1.xpose.msra.mxu0 0.0
        %270 = vmatprep.subr.mxu0 0.0
        %271 = vmatpush1.xpose.msra.mxu0 0.0
        %272 = vmatprep.subr.mxu0 0.0
        %273 = vmatpush1.xpose.msra.mxu0 0.0
        %274 = vmatprep.subr.mxu0 0.0
        %275 = vmatpush1.xpose.msra.mxu0 0.0
        %276 = vmatprep.subr.mxu0 0.0
        %277 = vmatpush1.xpose.msra.mxu0 0.0
        %278 = vmatprep.subr.mxu0 0.0
        %279 = vmatpush1.xpose.msra.mxu0 0.0
        %280 = vmatprep.subr.mxu0 0.0
        %281 = vmatpush1.xpose.msra.mxu0 0.0
        %282 = vmatprep.subr.mxu0 0.0
        %283 = vmatpush1.xpose.msra.mxu0 0.0
        %284 = vmatprep.subr.mxu0 0.0
        %285 = vmatpush1.xpose.msra.mxu0 0.0
        %286 = vmatprep.subr.mxu0 0.0
        %287 = vmatpush1.xpose.msra.mxu0 0.0
        %288 = vmatprep.subr.mxu0 0.0
        %289 = vmatpush1.xpose.msra.mxu0 0.0
        %290 = vmatprep.subr.mxu0 0.0
        %291 = vmatpush1.xpose.msra.mxu0 0.0
        %292 = vmatprep.subr.mxu0 0.0
        %293 = vmatpush1.xpose.msra.mxu0 0.0
        %294 = vmatprep.subr.mxu0 0.0
        %295 = vmatpush1.xpose.msra.mxu0 0.0
        %296 = vmatprep.subr.mxu0 0.0
        %297 = vmatpush1.xpose.msra.mxu0 0.0
        %298 = vmatprep.subr.mxu0 0.0
        %299 = vmatpush1.xpose.msra.mxu0 0.0
        %300 = vmatprep.subr.mxu0 0.0
        %301 = vmatpush1.xpose.msra.mxu0 0.0
        %302 = vmatprep.subr.mxu0 0.0
        %303 = vmatpush1.xpose.msra.mxu0 0.0
        %304 = vmatprep.subr.mxu0 0.0
        %305 = vmatpush1.xpose.msra.mxu0 0.0
        %306 = vmatprep.subr.mxu0 0.0
        %307 = vmatpush1.xpose.msra.mxu0 0.0
        %308 = vmatprep.subr.mxu0 0.0
        %309 = vmatpush1.xpose.msra.mxu0 0.0
        %310 = vmatprep.subr.mxu0 0.0
        %311 = vmatpush1.xpose.msra.mxu0 0.0
        %312 = vmatprep.subr.mxu0 0.0
        %313 = vmatpush1.xpose.msra.mxu0 0.0
        %314 = vmatprep.subr.mxu0 0.0
        %315 = vmatpush1.xpose.msra.mxu0 0.0
        %316 = vmatprep.subr.mxu0 0.0
        %317 = vmatpush1.xpose.msra.mxu0 0.0
        %318 = vmatprep.subr.mxu0 0.0
        %319 = vmatpush1.xpose.msra.mxu0 0.0
        %320 = vmatprep.subr.mxu0 0.0
        %321 = vmatpush1.xpose.msra.mxu0 0.0
        %322 = vmatprep.subr.mxu0 0.0
        %323 = vmatpush1.xpose.msra.mxu0 0.0
        %324 = vmatprep.subr.mxu0 0.0
        %325 = vmatpush1.xpose.msra.mxu0 0.0
        %326 = vmatprep.mubr.f32.mxu0 0.0
        %327 = vmatmul.mubr.f32.gmra.mrb[0].mxu0 %v257
        %v328 = vpop.f32.mrb[0].mxu0
        %v329 = vadd.f32 0.0, %v328
        %v330 = vpop.f32.mrb[0].mxu0
        %331 = vdwg.mxu0
        %s332 = smul.u32 %s32, 8
        %v333 = vlaneseq
        %v334 = vshrl.u32 %v333, 7
        %v335 = vstv %s332
        %v336 = vadd.s32 %v335, %v334
        %v337 = vlaneseq
        %v338 = vand.u32 %v337, 127
        %vm339 = vcmp.lt.s32.totalorder %v338, %v336
        %v340 = vsel %vm339, %v329, -1e+09
        %vm341 = vcmask 64512
        %v342 = vsel %vm341, %v340, -inf
        %343 = vmax.xlane.f32.xlu0 %v342
        %v344 = vpop.xlane.xlu0 %343
        %v345 = vsub.f32 %v340, %v344
        %v346 = vmul.f32 %v345, 1.442695
        %v347 = vpow.pop %v346
        %v348 = vsel %vm341, %v347, 0.0
        %349 = vadd.xlane.f32.xlu0 %v348
        %v350 = vpop.xlane.xlu0 %349
        %v351 = vrcp.pop %v350
        %v352 = vmul.f32 1.0, %v351
        %v353 = vmul.f32 %v347, %v352
        %v355 = vsel %vm341, %v353, 0
        %357 = vmatprep.subr.mxu0 0.0
        %358 = vmatpush1.msra.mxu0 %v254
        %359 = vmatprep.subr.mxu0 0.0
        %360 = vmatpush1.msra.mxu0 0.0
        %361 = vmatprep.subr.mxu0 0.0
        %362 = vmatpush1.msra.mxu0 0.0
        %363 = vmatprep.subr.mxu0 0.0
        %364 = vmatpush1.msra.mxu0 0.0
        %365 = vmatprep.subr.mxu0 0.0
        %366 = vmatpush1.msra.mxu0 0.0
        %367 = vmatprep.subr.mxu0 0.0
        %368 = vmatpush1.msra.mxu0 0.0
        %369 = vmatprep.subr.mxu0 0.0
        %370 = vmatpush1.msra.mxu0 0.0
        %371 = vmatprep.subr.mxu0 0.0
        %372 = vmatpush1.msra.mxu0 0.0
        %373 = vmatprep.subr.mxu0 0.0
        %374 = vmatpush1.msra.mxu0 0.0
        %375 = vmatprep.subr.mxu0 0.0
        %376 = vmatpush1.msra.mxu0 0.0
        %377 = vmatprep.subr.mxu0 0.0
        %378 = vmatpush1.msra.mxu0 0.0
        %379 = vmatprep.subr.mxu0 0.0
        %380 = vmatpush1.msra.mxu0 0.0
        %381 = vmatprep.subr.mxu0 0.0
        %382 = vmatpush1.msra.mxu0 0.0
        %383 = vmatprep.subr.mxu0 0.0
        %384 = vmatpush1.msra.mxu0 0.0
        %385 = vmatprep.subr.mxu0 0.0
        %386 = vmatpush1.msra.mxu0 0.0
        %387 = vmatprep.subr.mxu0 0.0
        %388 = vmatpush1.msra.mxu0 0.0
        %389 = vmatprep.subr.mxu0 0.0
        %390 = vmatpush1.msra.mxu0 0.0
        %391 = vmatprep.subr.mxu0 0.0
        %392 = vmatpush1.msra.mxu0 0.0
        %393 = vmatprep.subr.mxu0 0.0
        %394 = vmatpush1.msra.mxu0 0.0
        %395 = vmatprep.subr.mxu0 0.0
        %396 = vmatpush1.msra.mxu0 0.0
        %397 = vmatprep.subr.mxu0 0.0
        %398 = vmatpush1.msra.mxu0 0.0
        %399 = vmatprep.subr.mxu0 0.0
        %400 = vmatpush1.msra.mxu0 0.0
        %401 = vmatprep.subr.mxu0 0.0
        %402 = vmatpush1.msra.mxu0 0.0
        %403 = vmatprep.subr.mxu0 0.0
        %404 = vmatpush1.msra.mxu0 0.0
        %405 = vmatprep.subr.mxu0 0.0
        %406 = vmatpush1.msra.mxu0 0.0
        %407 = vmatprep.subr.mxu0 0.0
        %408 = vmatpush1.msra.mxu0 0.0
        %409 = vmatprep.subr.mxu0 0.0
        %410 = vmatpush1.msra.mxu0 0.0
        %411 = vmatprep.subr.mxu0 0.0
        %412 = vmatpush1.msra.mxu0 0.0
        %413 = vmatprep.subr.mxu0 0.0
        %414 = vmatpush1.msra.mxu0 0.0
        %415 = vmatprep.subr.mxu0 0.0
        %416 = vmatpush1.msra.mxu0 0.0
        %417 = vmatprep.subr.mxu0 0.0
        %418 = vmatpush1.msra.mxu0 0.0
        %419 = vmatprep.subr.mxu0 0.0
        %420 = vmatpush1.msra.mxu0 0.0
        %421 = vmatprep.mubr.f32.mxu0 0.0
        %422 = vmatmul.mubr.f32.gmra.mrb[0].mxu0 %v355
        %v423 = vpop.f32.mrb[0].mxu0
        %v424 = vadd.f32 0.0, %v423
        %v425 = vpop.f32.mrb[0].mxu0
        %426 = vdwg.mxu0
        %427 = vst.msk [vmem:[%s252] sm:$0xff] %vm341, %v353
        %428 = vst.msk [vmem:[%s245] sm:$0xff] %vm255, %v424
        %s429 = sand.u32 %s103, 1
        %s430 = scalar_lea.sflag [#allocation4], %s429
        %s431 = sand.u32 %s103, 1
        %s432 = smul.addr %s431, 8
        %s433 = scalar_lea.vmem [#allocation7], %s432
        %s434 = sand.u32 %s131, 1
        %s435 = scalar_lea.sflag [#allocation9], %s434
        %s436 = sand.u32 %s131, 1
        %s437 = smul.addr %s436, 8
        %s438 = scalar_lea.vmem [#allocation8], %s437
        // Predicated region
        $region37: #{tpu_custom_call.1} parent=27 // pred_check
          %p439 = pneg %p113
        $region38: #{tpu_custom_call.1} parent=27 // pred_check_branch
          %441 = sbr.rel (%p439) target = $region40
        $region39: #{tpu_custom_call.1} parent=27 // pred_region
          %s443 = ssub.s32 128, 128
          %444 = vsyncadd %s430, %s443
          %s445 = sadd.s32 %s32, %s31
          %s446 = smul.addr %s445, 128
          %s447 = scalar_lea.hbm %s2, %s446
          %s449 = sshll.u32 %s433, 4
          %s450 = int_to_ptr.vmem [resolvable:$true] %s449
          %452 = dma.vmem_to_hbm [thread:$0]  %s450, 128, %s447, %s430
        $region40: #{tpu_custom_call.1} parent=27 // pred_fallthru
          _
        // Predicated region
        $region41: #{tpu_custom_call.1} parent=27 // pred_check
          %p453 = pneg %p141
        $region42: #{tpu_custom_call.1} parent=27 // pred_check_branch
          %455 = sbr.rel (%p453) target = $region44
        $region43: #{tpu_custom_call.1} parent=27 // pred_region
          %s457 = ssub.s32 128, 128
          %458 = vsyncadd %s435, %s457
          %s459 = sadd.s32 %s32, %s31
          %s460 = smul.addr %s459, 128
          %s461 = scalar_lea.hbm %s3, %s460
          %s463 = sshll.u32 %s438, 4
          %s464 = int_to_ptr.vmem [resolvable:$true] %s463
          %466 = dma.vmem_to_hbm [thread:$0]  %s464, 128, %s461, %s435
        $region44: #{tpu_custom_call.1} parent=27 // pred_fallthru
          _
      $region28: #{tpu_custom_call.1} parent=5 // pred_fallthru
        _
      %p467 = scmp.le.s32.totalorder 2, %s22
      // Predicated region
      $region45: #{tpu_custom_call.1} parent=5 // pred_check
        %p468 = pneg %p467
      $region46: #{tpu_custom_call.1} parent=5 // pred_check_branch
        %470 = sbr.rel (%p468) target = $region48
      $region47: #{tpu_custom_call.1} parent=5 // pred_region
        %s471 = ssub.s32 %s22, 2
        // Predicated region
        $region49: #{tpu_custom_call.1} parent=47 // pred_check
          %p472 = pneg %p119
        $region50: #{tpu_custom_call.1} parent=47 // pred_check_branch
          %474 = sbr.rel (%p472) target = $region52
        $region51: #{tpu_custom_call.1} parent=47 // pred_region
          %s475 = sand.u32 %s104, 1
          %s476 = scalar_lea.sflag [#allocation4], %s475
          %s477 = sand.u32 %s104, 1
          %s478 = smul.addr %s477, 8
          %s479 = scalar_lea.vmem [#allocation7], %s478
          %480 = dma.done %s476, 128
        $region52: #{tpu_custom_call.1} parent=47 // pred_fallthru
          _
        // Predicated region
        $region53: #{tpu_custom_call.1} parent=47 // pred_check
          %p481 = pneg %p147
        $region54: #{tpu_custom_call.1} parent=47 // pred_check_branch
          %483 = sbr.rel (%p481) target = $region56
        $region55: #{tpu_custom_call.1} parent=47 // pred_region
          %s484 = sand.u32 %s132, 1
          %s485 = scalar_lea.sflag [#allocation9], %s484
          %s486 = sand.u32 %s132, 1
          %s487 = smul.addr %s486, 8
          %s488 = scalar_lea.vmem [#allocation8], %s487
          %489 = dma.done %s485, 128
        $region56: #{tpu_custom_call.1} parent=47 // pred_fallthru
          _
      $region48: #{tpu_custom_call.1} parent=5 // pred_fallthru
        _
    $region6: #{tpu_custom_call.1} parent=1 // loop_footer
      %s26 = sadd.s32 1, %s22
    $region7: #{tpu_custom_call.1} parent=1 // loop_footer_branch
      %21 = sbr.rel target = $region3
    $region8: #{tpu_custom_call.1} parent=1 // loop_exit
      _
    %490 = vsyncpa [#allocation3], 1
    %s491 = scalar_lea.sflag [#allocation3], 1
    %492 = vsyncpa %s491, 1
    %493 = vsyncpa [#allocation6], 1
    %s494 = scalar_lea.sflag [#allocation6], 1
    %495 = vsyncpa %s494, 1
    %496 = vsyncpa [#allocation4], 1
    %s497 = scalar_lea.sflag [#allocation4], 1
    %498 = vsyncpa %s497, 1
    %499 = vsyncpa [#allocation9], 1
    %s500 = scalar_lea.sflag [#allocation9], 1
    %501 = vsyncpa %s500, 1

</llo_original>
